<compile_context>
chip_gen: v7x
topology: tpu7x:2x2x1
jax: 0.10.0
libtpu: 0.0.40
codegen_flags: <defaults>
</compile_context>

<pallas_src>
import functools

import jax
import jax.numpy as jnp
from jax import lax
from jax.experimental import pallas as pl
from jax.experimental.pallas import tpu as pltpu

LANE = 128
_MAX_TILE_PIX = 65536        # hard cap on pixels (lanes) per grid step
_VREG_ELEMS_TARGET = 4096    # keep (c, chunk) temporaries ~4 vregs each


def _vmem_capacity_bytes():
    """Physical per-core VMEM (generation aware), with a safe fallback."""
    try:
        info = pltpu.get_tpu_info()
        v = getattr(info, "vmem_capacity_bytes", None)
        if v:
            return int(v)
    except Exception:
        pass
    return 64 * 1024 * 1024  # conservative: v7x per-core VMEM


def _ce2d_kernel(*refs, hw, ignore_label, tile_pix, chunk, n_chunks, unroll,
                 has_weight):
    if has_weight:
        pred_ref, targ_ref, w_ref, out_ref, sum_acc, den_acc, cnt_acc = refs
    else:
        pred_ref, targ_ref, out_ref, sum_acc, cnt_acc = refs
        w_ref = None
        den_acc = None

    j = pl.program_id(1)          # pixel-block index within the image
    c = pred_ref.shape[0]

    # Per-image accumulators: reset at the first pixel block of EVERY image so
    # the image axis can safely be "parallel" (each core owns its own images,
    # scratch and output blocks -> no cross-core races).
    @pl.when(j == 0)
    def _init():
        sum_acc[...] = jnp.zeros_like(sum_acc)
        cnt_acc[...] = jnp.zeros_like(cnt_acc)
        if has_weight:
            den_acc[...] = jnp.zeros_like(den_acc)

    # Loop-invariant values hoisted out of the chunk loop.
    cls_col = lax.broadcasted_iota(jnp.int32, (c, 1), 0)          # (c, 1)
    lane = lax.broadcasted_iota(jnp.int32, (1, chunk), 1)         # (1, chunk)
    base = j * tile_pix
    if has_weight:
        w_col = w_ref[...].astype(jnp.float32)                    # (c, 1)

    def body(k, carry):
        start = k * chunk
        if chunk % LANE == 0 and not isinstance(start, int):
            start = pl.multiple_of(start, LANE)
        x = pred_ref[:, pl.ds(start, chunk)].astype(jnp.float32)  # (c, chunk)
        t = targ_ref[:, pl.ds(start, chunk)]                      # (1, chunk)

        # Valid pixel: inside h*w (ragged tail of the last block), not the
        # ignore label.  Mask is applied to the FINAL accumulated values.
        pos = base + start + lane
        valid = jnp.logical_and(
            jnp.logical_and(t >= 0, t != jnp.int32(ignore_label)),
            pos < hw)

        # Per-pixel log-sum-exp over classes (sublane reduce).
        m = jnp.max(x, axis=0, keepdims=True)                               # (1, chunk)
        lse = m + jnp.log(jnp.sum(jnp.exp(x - m), axis=0, keepdims=True))   # (1, chunk)

        # One-hot gather via a (c, 1) class column broadcast against the
        # (1, chunk) labels -- no full (c, tile) iota per grid step.
        onehot = cls_col == t                                               # (c, chunk)
        x_t = jnp.sum(jnp.where(onehot, x, 0.0), axis=0, keepdims=True)     # (1, chunk)
        loss = lse - x_t
        if has_weight:
            w_t = jnp.sum(jnp.where(onehot, w_col, 0.0), axis=0, keepdims=True)
            loss = w_t * loss
            den_acc[...] += jnp.where(valid, w_t, 0.0)
        sum_acc[...] += jnp.where(valid, loss, 0.0)
        cnt_acc[...] += valid.astype(jnp.float32)
        return carry

    if n_chunks == 1:
        body(0, 0)
    else:
        lax.fori_loop(0, n_chunks, body, 0, unroll=unroll)

    # Per-image finalize: single cross-lane reduce, packed into a lane-dense
    # (1, 128) output row: [loss_sum, weight_denominator, valid_count, 0...].
    @pl.when(j == pl.num_programs(1) - 1)
    def _finalize():
        total = jnp.sum(sum_acc[...])
        cnt = jnp.sum(cnt_acc[...])
        den = jnp.sum(den_acc[...]) if has_weight else cnt
        lane128 = lax.broadcasted_iota(jnp.int32, (1, 128), 1)
        row = jnp.where(lane128 == 0, total,
              jnp.where(lane128 == 1, den,
              jnp.where(lane128 == 2, cnt, jnp.float32(0.0))))
        out_ref[...] = row


def cross_entropy_2d(predict, target, weight=None, *,
                     size_average=True, ignore_label=255):
    """2D cross-entropy loss.

    predict: (n, c, h, w) logits (f32 or bf16 -- bf16 halves HBM traffic and
    is cast to f32 inside the kernel), target: (n, h, w) integer labels.
    """
    assert predict.ndim == 4, "predict must be (n, c, h, w)"
    assert target.ndim == 3, "target must be (n, h, w)"
    n, c, h, w = predict.shape
    assert target.shape == (n, h, w)

    hw = h * w
    has_weight = weight is not None
    itemsize = jnp.dtype(predict.dtype).itemsize

    # Generation-aware budgets: v7x has 64 MiB VMEM/core, v5e/v6e 128 MiB.
    vmem_bytes = _vmem_capacity_bytes()
    big_vmem = vmem_bytes >= 96 * 1024 * 1024
    tile_budget = (8 if big_vmem else 6) * 1024 * 1024    # per predict buffer
    vmem_limit = (64 if big_vmem else 48) * 1024 * 1024   # scoped VMEM limit

    # chunk: pixels per in-kernel compute step, sized so (c, chunk) temps fit
    # comfortably in the 64-vreg file.  tile_pix: pixels per DMA/grid step,
    # as large as the byte budget allows (amortizes ~0.35us per-step cost).
    if hw >= LANE:
        aligned_hw = (hw // LANE) * LANE
        chunk = ((_VREG_ELEMS_TARGET // max(c, 1)) // LANE) * LANE
        chunk = max(LANE, min(1024, chunk))
        chunk = min(chunk, aligned_hw)
        budget_pix = (tile_budget // (itemsize * max(c, 1))) // chunk * chunk
        cap_pix = _MAX_TILE_PIX // chunk * chunk
        hw_pix = aligned_hw // chunk * chunk
        tile_pix = max(chunk, min(budget_pix, cap_pix, hw_pix))
    else:
        chunk = hw
        tile_pix = hw
    n_chunks = tile_pix // chunk
    unroll = True if n_chunks <= 8 else 8
    grid_j = pl.cdiv(hw, tile_pix)

    # Free (contiguous) reshapes only: no host-side pad / transpose / copy.
    p3 = predict.reshape(n, c, hw)
    t3 = target.astype(jnp.int32).reshape(n, 1, hw)

    kernel = functools.partial(
        _ce2d_kernel, hw=hw, ignore_label=ignore_label, tile_pix=tile_pix,
        chunk=chunk, n_chunks=n_chunks, unroll=unroll, has_weight=has_weight)

    # TODO(synk): if xprof still shows exposed DMA for c<=8 after the larger
    # tiles, add pipeline_mode=pl.Buffered(3) to the predict BlockSpec.
    in_specs = [
        pl.BlockSpec((None, c, tile_pix), lambda i, j: (i, 0, j)),
        pl.BlockSpec((None, 1, tile_pix), lambda i, j: (i, 0, j)),
    ]
    args = [p3, t3]
    scratch = [pltpu.VMEM((1, chunk), jnp.float32),   # weighted-loss partials
               pltpu.VMEM((1, chunk), jnp.float32)]   # valid-count partials
    if has_weight:
        w2 = jnp.asarray(weight, jnp.float32).reshape(c, 1)
        in_specs.append(pl.BlockSpec((c, 1), lambda i, j: (0, 0)))
        args.append(w2)
        scratch.insert(1, pltpu.VMEM((1, chunk), jnp.float32))  # weight denom

    npix = n * hw
    cost = pl.CostEstimate(
        flops=8 * c * npix,
        transcendentals=(c + 1) * npix,
        bytes_accessed=int(predict.size) * itemsize + npix * 4
                       + (c * 4 if has_weight else 0) + n * 128 * 4)

    out = pl.pallas_call(
        kernel,
        out_shape=jax.ShapeDtypeStruct((n, 1, 128), jnp.float32),
        grid_spec=pltpu.PrefetchScalarGridSpec(
            num_scalar_prefetch=0,
            grid=(n, grid_j),
            in_specs=in_specs,
            out_specs=pl.BlockSpec((None, 1, 128), lambda i, j: (i, 0, 0)),
            scratch_shapes=scratch,
        ),
        compiler_params=pltpu.CompilerParams(
            dimension_semantics=("parallel", "arbitrary"),
            vmem_limit_bytes=vmem_limit),
        cost_estimate=cost,
    )(*args)

    # Tiny (n, 3) reduction + divide in plain JAX.
    parts = out[:, 0, :3]
    total = jnp.sum(parts[:, 0])
    den = jnp.sum(parts[:, 1])
    cnt = jnp.sum(parts[:, 2])
    reduced = total / den if size_average else total
    return jnp.where(cnt > 0.0, reduced, jnp.float32(0.0))


def _reference(predict, target, weight=None, *, size_average=True, ignore_label=255):
    n, c, h, w = predict.shape
    logits = jnp.transpose(predict, (0, 2, 3, 1)).reshape(-1, c).astype(jnp.float32)
    t = target.reshape(-1).astype(jnp.int32)
    valid = jnp.logical_and(t >= 0, t != ignore_label)
    t_safe = jnp.clip(t, 0, c - 1)
    lse = jax.scipy.special.logsumexp(logits, axis=-1)
    x_t = jnp.take_along_axis(logits, t_safe[:, None], axis=-1)[:, 0]
    wv = jnp.ones((c,), jnp.float32) if weight is None else jnp.asarray(weight, jnp.float32)
    w_t = wv[t_safe]
    per = jnp.where(valid, w_t * (lse - x_t), 0.0)
    w_t = jnp.where(valid, w_t, 0.0)
    total = per.sum()
    denom = w_t.sum()
    cnt = valid.sum()
    red = total / denom if size_average else total
    return jnp.where(cnt > 0, red, jnp.float32(0.0))


if __name__ == "__main__":
    key = jax.random.PRNGKey(0)
    k1, k2, k3, k4 = jax.random.split(key, 4)

    n, c, h, w = 2, 4, 16, 16
    predict = jax.random.normal(k1, (n, c, h, w), dtype=jnp.float32)
    target = jax.random.randint(k2, (n, h, w), 0, c, dtype=jnp.int32)
    ignore_mask = jax.random.bernoulli(k3, 0.2, (n, h, w))
    target = jnp.where(ignore_mask, jnp.int32(255), target)

    # Mean over valid pixels (size_average=True, default).
    loss_mean = jax.block_until_ready(
        cross_entropy_2d(predict, target, size_average=True, ignore_label=255))
    ref_mean = jax.block_until_ready(
        _reference(predict, target, size_average=True, ignore_label=255))
    assert jnp.allclose(loss_mean, ref_mean, rtol=1e-5, atol=1e-5), (loss_mean, ref_mean)

    # Sum reduction (size_average=False).
    loss_sum = jax.block_until_ready(
        cross_entropy_2d(predict, target, size_average=False, ignore_label=255))
    ref_sum = jax.block_until_ready(
        _reference(predict, target, size_average=False, ignore_label=255))
    assert jnp.allclose(loss_sum, ref_sum, rtol=1e-5, atol=1e-4), (loss_sum, ref_sum)

    # Per-class weights (specialized weighted path).
    wts = jax.random.uniform(k4, (c,), jnp.float32, 0.5, 1.5)
    loss_w = jax.block_until_ready(
        cross_entropy_2d(predict, target, weight=wts, size_average=True, ignore_label=255))
    ref_w = jax.block_until_ready(
        _reference(predict, target, weight=wts, size_average=True, ignore_label=255))
    assert jnp.allclose(loss_w, ref_w, rtol=1e-5, atol=1e-5), (loss_w, ref_w)

    print("KERNEL_OK")
</pallas_src>

<mosaic_0001>
module attributes {stable_mosaic.version = 11 : i64} {
  func.func @_ce2d_kernel(%arg0: i32, %arg1: i32, %arg2: memref<1x4x256xf32, #tpu.memory_space<vmem>>, %arg3: memref<1x1x256xi32, #tpu.memory_space<vmem>>, %arg4: memref<1x1x128xf32, #tpu.memory_space<vmem>>, %arg5: memref<1x256xf32, #tpu.memory_space<vmem>>, %arg6: memref<1x256xf32, #tpu.memory_space<vmem>>) attributes {dimension_semantics = [#tpu.dimension_semantics<parallel>, #tpu.dimension_semantics<arbitrary>], iteration_bounds = array<i64: 2, 1>, scalar_prefetch = 0 : i64, scratch_operands = 2 : i64, tpu.core_type = #tpu.core_type<tc>, window_params = [{transform_indices = @transform_0, window_bounds = array<i64: 1, 4, 256>}, {transform_indices = @transform_1, window_bounds = array<i64: 1, 1, 256>}, {transform_indices = @transform_2, window_bounds = array<i64: 1, 1, 128>}]} {
    %c0_i32 = arith.constant 0 : i32
    %0 = arith.cmpi eq, %arg1, %c0_i32 : i32
    %1 = arith.extui %0 : i1 to i32
    %c0_i32_0 = arith.constant 0 : i32
    %2 = arith.cmpi ne, %1, %c0_i32_0 : i32
    scf.if %2 {
      %cst_23 = arith.constant 0.000000e+00 : f32
      %51 = vector.broadcast %cst_23 : f32 to vector<1x256xf32>
      %c0_24 = arith.constant 0 : index
      %c0_25 = arith.constant 0 : index
      %52 = vector.load %arg5[%c0_24, %c0_25] : memref<1x256xf32, #tpu.memory_space<vmem>>, vector<1x256xf32>
      tpu.vector_store %arg5[%c0_24, %c0_25], %51 {strides = array<i32>} : memref<1x256xf32, #tpu.memory_space<vmem>>, vector<1x256xf32>,
      %cst_26 = arith.constant 0.000000e+00 : f32
      %53 = vector.broadcast %cst_26 : f32 to vector<1x256xf32>
      %c0_27 = arith.constant 0 : index
      %c0_28 = arith.constant 0 : index
      %54 = vector.load %arg6[%c0_27, %c0_28] : memref<1x256xf32, #tpu.memory_space<vmem>>, vector<1x256xf32>
      tpu.vector_store %arg6[%c0_27, %c0_28], %53 {strides = array<i32>} : memref<1x256xf32, #tpu.memory_space<vmem>>, vector<1x256xf32>,
    } else {
    }
    %3 = tpu.iota {dimensions = array<i32: 0>} : vector<4x1xi32>
    %4 = tpu.iota {dimensions = array<i32: 1>} : vector<1x256xi32>
    %c256_i32 = arith.constant 256 : i32
    %5 = arith.muli %arg1, %c256_i32 : i32
    %c0 = arith.constant 0 : index
    %c0_1 = arith.constant 0 : index
    %c0_2 = arith.constant 0 : index
    %6 = vector.load %arg2[%c0, %c0_1, %c0_2] : memref<1x4x256xf32, #tpu.memory_space<vmem>>, vector<1x4x256xf32>
    %7 = vector.shape_cast %6 : vector<1x4x256xf32> to vector<4x256xf32>
    %c0_3 = arith.constant 0 : index
    %c0_4 = arith.constant 0 : index
    %c0_5 = arith.constant 0 : index
    %8 = vector.load %arg3[%c0_3, %c0_4, %c0_5] : memref<1x1x256xi32, #tpu.memory_space<vmem>>, vector<1x1x256xi32>
    %9 = vector.shape_cast %8 : vector<1x1x256xi32> to vector<1x256xi32>
    %c0_i32_6 = arith.constant 0 : i32
    %10 = arith.addi %5, %c0_i32_6 : i32
    %11 = vector.broadcast %10 : i32 to vector<1x256xi32>
    %12 = arith.addi %11, %4 : vector<1x256xi32>
    %c0_i32_7 = arith.constant 0 : i32
    %13 = vector.broadcast %c0_i32_7 : i32 to vector<1x256xi32>
    %14 = arith.cmpi sge, %9, %13 : vector<1x256xi32>
    %c255_i32 = arith.constant 255 : i32
    %15 = vector.broadcast %c255_i32 : i32 to vector<1x256xi32>
    %16 = arith.cmpi ne, %9, %15 : vector<1x256xi32>
    %17 = arith.andi %14, %16 : vector<1x256xi1>
    %c256_i32_8 = arith.constant 256 : i32
    %18 = vector.broadcast %c256_i32_8 : i32 to vector<1x256xi32>
    %19 = arith.cmpi slt, %12, %18 : vector<1x256xi32>
    %20 = arith.andi %17, %19 : vector<1x256xi1>
    %cst = arith.constant dense<0xFF800000> : vector<256xf32>
    %21 = vector.multi_reduction <maximumf>, %7, %cst [0] : vector<4x256xf32> to vector<256xf32>
    %22 = vector.shape_cast %21 : vector<256xf32> to vector<1x256xf32>
    %23 = vector.broadcast %22 : vector<1x256xf32> to vector<4x256xf32>
    %24 = arith.subf %7, %23 : vector<4x256xf32>
    %25 = math.exp %24 : vector<4x256xf32>
    %cst_9 = arith.constant dense<0.000000e+00> : vector<256xf32>
    %26 = vector.multi_reduction <add>, %25, %cst_9 [0] : vector<4x256xf32> to vector<256xf32>
    %27 = vector.shape_cast %26 : vector<256xf32> to vector<1x256xf32>
    %28 = math.log %27 : vector<1x256xf32>
    %29 = arith.addf %22, %28 : vector<1x256xf32>
    %30 = vector.broadcast %3 : vector<4x1xi32> to vector<4x256xi32>
    %31 = vector.broadcast %9 : vector<1x256xi32> to vector<4x256xi32>
    %32 = arith.cmpi eq, %30, %31 : vector<4x256xi32>
    %cst_10 = arith.constant 0.000000e+00 : f32
    %33 = vector.broadcast %cst_10 : f32 to vector<4x256xf32>
    %34 = arith.select %32, %7, %33 : vector<4x256xi1>, vector<4x256xf32>
    %cst_11 = arith.constant dense<0.000000e+00> : vector<256xf32>
    %35 = vector.multi_reduction <add>, %34, %cst_11 [0] : vector<4x256xf32> to vector<256xf32>
    %36 = vector.shape_cast %35 : vector<256xf32> to vector<1x256xf32>
    %37 = arith.subf %29, %36 : vector<1x256xf32>
    %c0_12 = arith.constant 0 : index
    %c0_13 = arith.constant 0 : index
    %38 = vector.load %arg5[%c0_12, %c0_13] : memref<1x256xf32, #tpu.memory_space<vmem>>, vector<1x256xf32>
    %cst_14 = arith.constant 0.000000e+00 : f32
    %39 = vector.broadcast %cst_14 : f32 to vector<1x256xf32>
    %40 = arith.select %20, %37, %39 : vector<1x256xi1>, vector<1x256xf32>
    %41 = arith.addf %38, %40 : vector<1x256xf32>
    %c0_15 = arith.constant 0 : index
    %c0_16 = arith.constant 0 : index
    %42 = vector.load %arg5[%c0_15, %c0_16] : memref<1x256xf32, #tpu.memory_space<vmem>>, vector<1x256xf32>
    tpu.vector_store %arg5[%c0_15, %c0_16], %41 {strides = array<i32>} : memref<1x256xf32, #tpu.memory_space<vmem>>, vector<1x256xf32>,
    %c0_17 = arith.constant 0 : index
    %c0_18 = arith.constant 0 : index
    %43 = vector.load %arg6[%c0_17, %c0_18] : memref<1x256xf32, #tpu.memory_space<vmem>>, vector<1x256xf32>
    %44 = arith.extui %20 : vector<1x256xi1> to vector<1x256xi32>
    %45 = arith.sitofp %44 : vector<1x256xi32> to vector<1x256xf32>
    %46 = arith.addf %43, %45 : vector<1x256xf32>
    %c0_19 = arith.constant 0 : index
    %c0_20 = arith.constant 0 : index
    %47 = vector.load %arg6[%c0_19, %c0_20] : memref<1x256xf32, #tpu.memory_space<vmem>>, vector<1x256xf32>
    tpu.vector_store %arg6[%c0_19, %c0_20], %46 {strides = array<i32>} : memref<1x256xf32, #tpu.memory_space<vmem>>, vector<1x256xf32>,
    %c0_i32_21 = arith.constant 0 : i32
    %48 = arith.cmpi eq, %arg1, %c0_i32_21 : i32
    %49 = arith.extui %48 : i1 to i32
    %c0_i32_22 = arith.constant 0 : i32
    %50 = arith.cmpi ne, %49, %c0_i32_22 : i32
    scf.if %50 {
      %c0_23 = arith.constant 0 : index
      %c0_24 = arith.constant 0 : index
      %51 = vector.load %arg5[%c0_23, %c0_24] : memref<1x256xf32, #tpu.memory_space<vmem>>, vector<1x256xf32>
      %52 = vector.shape_cast %51 : vector<1x256xf32> to vector<1x1x256xf32>
      %cst_25 = arith.constant dense<0.000000e+00> : vector<1xf32>
      %53 = vector.multi_reduction <add>, %52, %cst_25 [1, 2] : vector<1x1x256xf32> to vector<1xf32>
      %54 = vector.shape_cast %53 : vector<1xf32> to vector<1x1x1xf32>
      %55 = vector.extract %54[0, 0, 0] : f32 from vector<1x1x1xf32>
      %c0_26 = arith.constant 0 : index
      %c0_27 = arith.constant 0 : index
      %56 = vector.load %arg6[%c0_26, %c0_27] : memref<1x256xf32, #tpu.memory_space<vmem>>, vector<1x256xf32>
      %57 = vector.shape_cast %56 : vector<1x256xf32> to vector<1x1x256xf32>
      %cst_28 = arith.constant dense<0.000000e+00> : vector<1xf32>
      %58 = vector.multi_reduction <add>, %57, %cst_28 [1, 2] : vector<1x1x256xf32> to vector<1xf32>
      %59 = vector.shape_cast %58 : vector<1xf32> to vector<1x1x1xf32>
      %60 = vector.extract %59[0, 0, 0] : f32 from vector<1x1x1xf32>
      %61 = tpu.iota {dimensions = array<i32: 1>} : vector<1x128xi32>
      %c0_i32_29 = arith.constant 0 : i32
      %62 = vector.broadcast %c0_i32_29 : i32 to vector<1x128xi32>
      %63 = arith.cmpi eq, %61, %62 : vector<1x128xi32>
      %c1_i32 = arith.constant 1 : i32
      %64 = vector.broadcast %c1_i32 : i32 to vector<1x128xi32>
      %65 = arith.cmpi eq, %61, %64 : vector<1x128xi32>
      %c2_i32 = arith.constant 2 : i32
      %66 = vector.broadcast %c2_i32 : i32 to vector<1x128xi32>
      %67 = arith.cmpi eq, %61, %66 : vector<1x128xi32>
      %cst_30 = arith.constant 0.000000e+00 : f32
      %68 = vector.broadcast %60 : f32 to vector<1x128xf32>
      %69 = vector.broadcast %cst_30 : f32 to vector<1x128xf32>
      %70 = arith.select %67, %68, %69 : vector<1x128xi1>, vector<1x128xf32>
      %71 = vector.broadcast %60 : f32 to vector<1x128xf32>
      %72 = arith.select %65, %71, %70 : vector<1x128xi1>, vector<1x128xf32>
      %73 = vector.broadcast %55 : f32 to vector<1x128xf32>
      %74 = arith.select %63, %73, %72 : vector<1x128xi1>, vector<1x128xf32>
      %c0_31 = arith.constant 0 : index
      %c0_32 = arith.constant 0 : index
      %c0_33 = arith.constant 0 : index
      %75 = vector.load %arg4[%c0_31, %c0_32, %c0_33] : memref<1x1x128xf32, #tpu.memory_space<vmem>>, vector<1x1x128xf32>
      %76 = vector.shape_cast %75 : vector<1x1x128xf32> to vector<1x128xf32>
      %77 = vector.shape_cast %74 : vector<1x128xf32> to vector<1x1x128xf32>
      tpu.vector_store %arg4[%c0_31, %c0_32, %c0_33], %77 {strides = array<i32>} : memref<1x1x128xf32, #tpu.memory_space<vmem>>, vector<1x1x128xf32>,
    } else {
    }
    return
  }
  func.func @transform_0(%arg0: i32, %arg1: i32) -> (i32, i32, i32) {
    %c0_i32 = arith.constant 0 : i32
    %c0_i32_0 = arith.constant 0 : i32
    return %arg0, %c0_i32, %arg1 : i32, i32, i32
  }
  func.func @transform_1(%arg0: i32, %arg1: i32) -> (i32, i32, i32) {
    %c0_i32 = arith.constant 0 : i32
    %c0_i32_0 = arith.constant 0 : i32
    return %arg0, %c0_i32, %arg1 : i32, i32, i32
  }
  func.func @transform_2(%arg0: i32, %arg1: i32) -> (i32, i32, i32) {
    %c0_i32 = arith.constant 0 : i32
    %c0_i32_0 = arith.constant 0 : i32
    %c0_i32_1 = arith.constant 0 : i32
    return %arg0, %c0_i32, %c0_i32_0 : i32, i32, i32
  }
}

</mosaic_0001>

<llo_original>
// kernel: tpu_custom_call.1
$region0: #{tpu_custom_call.1}
  #allocation0 [shape = 'u32[]', space=smem, size = 0x4, offset = 0x4, fixed_abs, tag = 'smem constant byte address 0x4 - core index']
  #allocation1 [shape = 'u32[144,128]{1,0:T(1,128)}', space=vmem, size = 0x12000, scoped, tag = 'internal scratch']
  #allocation2 [shape = 'f32[1,256]{1,0:T(1,128)}', space=vmem, size = 0x400, scoped, tag = 'scratch operand']
  #allocation3 [shape = 'f32[1,256]{1,0:T(1,128)}', space=vmem, size = 0x400, scoped, tag = 'scratch operand']
  %s0 = inlined_call_operand.hbm [shape: f32[2,4,256], index: 0, kind: input, shape index: {}]
  %s1 = inlined_call_operand.hbm [shape: s32[2,1,256], index: 1, kind: input, shape index: {}]
  %s2 = inlined_call_operand.hbm [shape: f32[2,1,128], index: 2, kind: output, shape index: {}]
  %s3 = sld [smem:[#allocation0]]
  $region57: #{tpu_custom_call.1} parent=0
    _
  %s5 = ssub.s32 1, %s3
  %s6 = scalar_select 0, %s5, %s3
  $region1: #{tpu_custom_call.1} parent=0
    #allocation4 [shape = 'u8[8192]{0}', space=vmem, size = 0x2000, scoped, tag = 'input window, operand 0']
    #allocation5 [shape = 's32[2]{0}', space=sflag, size = 0x8, scoped, tag = 'scoped memory for tpu_custom_call.1']
    #allocation6 [shape = 's32[2]{0}', space=sflag, size = 0x8, scoped, tag = 'scoped memory for tpu_custom_call.1']
    #allocation7 [shape = 'u8[2048]{0}', space=vmem, size = 0x800, scoped, tag = 'input window, operand 1']
    #allocation8 [shape = 's32[2]{0}', space=sflag, size = 0x8, scoped, tag = 'scoped memory for tpu_custom_call.1']
    #allocation9 [shape = 'u8[1024]{0}', space=vmem, size = 0x400, scoped, tag = 'output window, operand 0']
    %7 = vsyncpa [#allocation5], 0
    %s8 = scalar_lea.sflag [#allocation5], 1
    %9 = vsyncpa %s8, 0
    %10 = vsyncpa [#allocation8], 0
    %s11 = scalar_lea.sflag [#allocation8], 1
    %12 = vsyncpa %s11, 0
    %13 = vsyncpa [#allocation6], 0
    %s14 = scalar_lea.sflag [#allocation6], 1
    %15 = vsyncpa %s14, 0
    loop: start=0, step=1, limit=4
    $region2: #{tpu_custom_call.1} parent=1 // loop_pre_header
      _
    $region3: #{tpu_custom_call.1} parent=1 // loop_header
      %s17 = sphi 0, %s21
      %p18 = scmp.ge.s32.totalorder %s17, 4
      %s24 = sphi 0, %s36
      %s25 = sphi 0, %s32
      %s26 = sphi 0, %s24
      %s27 = sphi 0, %s25
      %s28 = sphi 0, %s26
      %s29 = sphi 0, %s27
      %s41 = sphi 0, %s43
      %s44 = sphi 0, %s41
      %s45 = sphi 0, %s44
      %s61 = sphi 0, %s45
      %s69 = sphi 0, %s71
      %s72 = sphi 0, %s69
      %s73 = sphi 0, %s72
      %s89 = sphi 0, %s73
      %s95 = sphi 0, %s97
      %s98 = sphi 0, %s95
      %s99 = sphi 0, %s98
      %s115 = sphi 0, %s99
    $region4: #{tpu_custom_call.1} parent=1 // loop_header_branch
      %20 = sbr.rel (%p18) target = $region8
    $region5: #{tpu_custom_call.1} parent=1 // loop_body
      %s22 = ssub.s32 %s17, 1
      %s23 = ssub.s32 %s17, 2
      %s30 = sadd.s32 1, %s25
      %p31 = scmp.ge.s32.totalorder %s30, 1
      %s32 = scalar_select %p31, 0, %s30
      %s33 = sadd.s32 1, %s24
      %s34 = scalar_select %p31, %s33, %s24
      %p35 = scmp.ge.s32.totalorder %s34, 2
      %s36 = scalar_select %p35, 0, %s34
      %s37 = ssub.s32 %s24, %s36
      %s38 = ssub.s32 %s25, %s32
      %s39 = sor.u32 %s37, %s38
      %p40 = scmp.eq.s32.totalorder %s39, 0
      %s42 = sadd.s32 %s41, 1
      %s43 = scalar_select %p40, %s41, %s42
      %p46 = pneg %p40
      %p47 = scmp.eq.s32.totalorder %s17, 1
      %p48 = por %p46, %p47
      %p49 = scmp.ne.s32.totalorder %s41, %s44
      %p50 = scmp.eq.s32.totalorder %s17, 0
      %p51 = por %p49, %p50
      %p52 = scmp.ne.s32.totalorder %s41, %s44
      %p53 = scmp.eq.s32.totalorder %s22, 1
      %p54 = por %p52, %p53
      %p55 = scmp.ne.s32.totalorder %s44, %s45
      %p56 = scmp.eq.s32.totalorder %s22, 0
      %p57 = por %p55, %p56
      %p58 = scmp.ne.s32.totalorder %s44, %s45
      %p59 = scmp.eq.s32.totalorder %s23, 1
      %p60 = por %p58, %p59
      %p62 = scmp.ne.s32.totalorder %s45, %s61
      %p63 = scmp.eq.s32.totalorder %s23, 0
      %p64 = por %p62, %p63
      %s65 = ssub.s32 %s24, %s36
      %s66 = ssub.s32 %s25, %s32
      %s67 = sor.u32 %s65, %s66
      %p68 = scmp.eq.s32.totalorder %s67, 0
      %s70 = sadd.s32 %s69, 1
      %s71 = scalar_select %p68, %s69, %s70
      %p74 = pneg %p68
      %p75 = scmp.eq.s32.totalorder %s17, 1
      %p76 = por %p74, %p75
      %p77 = scmp.ne.s32.totalorder %s69, %s72
      %p78 = scmp.eq.s32.totalorder %s17, 0
      %p79 = por %p77, %p78
      %p80 = scmp.ne.s32.totalorder %s69, %s72
      %p81 = scmp.eq.s32.totalorder %s22, 1
      %p82 = por %p80, %p81
      %p83 = scmp.ne.s32.totalorder %s72, %s73
      %p84 = scmp.eq.s32.totalorder %s22, 0
      %p85 = por %p83, %p84
      %p86 = scmp.ne.s32.totalorder %s72, %s73
      %p87 = scmp.eq.s32.totalorder %s23, 1
      %p88 = por %p86, %p87
      %p90 = scmp.ne.s32.totalorder %s73, %s89
      %p91 = scmp.eq.s32.totalorder %s23, 0
      %p92 = por %p90, %p91
      %s93 = ssub.s32 %s24, %s36
      %p94 = scmp.eq.s32.totalorder %s93, 0
      %s96 = sadd.s32 %s95, 1
      %s97 = scalar_select %p94, %s95, %s96
      %p100 = pneg %p94
      %p101 = scmp.eq.s32.totalorder %s17, 1
      %p102 = por %p100, %p101
      %p103 = scmp.ne.s32.totalorder %s95, %s98
      %p104 = scmp.eq.s32.totalorder %s17, 0
      %p105 = por %p103, %p104
      %p106 = scmp.ne.s32.totalorder %s95, %s98
      %p107 = scmp.eq.s32.totalorder %s22, 1
      %p108 = por %p106, %p107
      %p109 = scmp.ne.s32.totalorder %s98, %s99
      %p110 = scmp.eq.s32.totalorder %s22, 0
      %p111 = por %p109, %p110
      %p112 = scmp.ne.s32.totalorder %s98, %s99
      %p113 = scmp.eq.s32.totalorder %s23, 1
      %p114 = por %p112, %p113
      %p116 = scmp.ne.s32.totalorder %s99, %s115
      %p117 = scmp.eq.s32.totalorder %s23, 0
      %p118 = por %p116, %p117
      %p119 = scmp.le.s32.totalorder 1, %s17
      %p120 = scmp.lt.s32.totalorder %s17, 3
      %p121 = pnand %p119, %p120
      %p122 = pneg %p121
      // Predicated region
      $region9: #{tpu_custom_call.1} parent=5 // pred_check
        _
      $region10: #{tpu_custom_call.1} parent=5 // pred_check_branch
        %124 = sbr.rel (%p121) target = $region12
      $region11: #{tpu_custom_call.1} parent=5 // pred_region
        %s125 = ssub.s32 %s17, 1
      $region12: #{tpu_custom_call.1} parent=5 // pred_fallthru
        _
      %p126 = scmp.lt.s32.totalorder %s17, 2
      // Predicated region
      $region13: #{tpu_custom_call.1} parent=5 // pred_check
        %p127 = pneg %p126
      $region14: #{tpu_custom_call.1} parent=5 // pred_check_branch
        %129 = sbr.rel (%p127) target = $region16
      $region15: #{tpu_custom_call.1} parent=5 // pred_region
        // Predicated region
        $region17: #{tpu_custom_call.1} parent=15 // pred_check
          %p130 = pneg %p51
        $region18: #{tpu_custom_call.1} parent=15 // pred_check_branch
          %132 = sbr.rel (%p130) target = $region20
        $region19: #{tpu_custom_call.1} parent=15 // pred_region
          %s133 = sand.u32 %s41, 1
          %s134 = scalar_lea.sflag [#allocation5], %s133
          %s135 = sand.u32 %s41, 1
          %s136 = smul.addr %s135, 8
          %s137 = scalar_lea.vmem [#allocation4], %s136
          %s138 = smul.u32 2, %s25
          %s140 = ssub.s32 128, 128
          %141 = vsyncadd %s134, %s140
          %s142 = smul.addr %s24, 2
          %s143 = sadd.s32 %s138, %s142
          %s144 = smul.addr %s143, 64
          %s145 = scalar_lea.hbm %s0, %s144
          %s147 = sshll.u32 %s137, 4
          %s148 = int_to_ptr.vmem [resolvable:$true] %s147
          %150 = dma.hbm_to_vmem [thread:$0]  %s145, 128, %s148, %s134
        $region20: #{tpu_custom_call.1} parent=15 // pred_fallthru
          _
        // Predicated region
        $region21: #{tpu_custom_call.1} parent=15 // pred_check
          %p151 = pneg %p79
        $region22: #{tpu_custom_call.1} parent=15 // pred_check_branch
          %153 = sbr.rel (%p151) target = $region24
        $region23: #{tpu_custom_call.1} parent=15 // pred_region
          %s154 = sand.u32 %s69, 1
          %s155 = scalar_lea.sflag [#allocation8], %s154
          %s156 = sand.u32 %s69, 1
          %s157 = smul.addr %s156, 2
          %s158 = scalar_lea.vmem [#allocation7], %s157
          %s159 = smul.u32 2, %s25
          %s161 = ssub.s32 32, 32
          %162 = vsyncadd %s155, %s161
          %s163 = smul.addr %s24, 2
          %s164 = sadd.s32 %s159, %s163
          %s165 = smul.addr %s164, 16
          %s166 = scalar_lea.hbm %s1, %s165
          %s168 = sshll.u32 %s158, 4
          %s169 = int_to_ptr.vmem [resolvable:$true] %s168
          %171 = dma.hbm_to_vmem [thread:$0]  %s166, 32, %s169, %s155
        $region24: #{tpu_custom_call.1} parent=15 // pred_fallthru
          _
      $region16: #{tpu_custom_call.1} parent=5 // pred_fallthru
        _
      %p172 = scmp.le.s32.totalorder 1, %s17
      %p173 = scmp.lt.s32.totalorder %s17, 3
      %p174 = pnand %p172, %p173
      %p175 = pneg %p174
      // Predicated region
      $region25: #{tpu_custom_call.1} parent=5 // pred_check
        _
      $region26: #{tpu_custom_call.1} parent=5 // pred_check_branch
        %177 = sbr.rel (%p174) target = $region28
      $region27: #{tpu_custom_call.1} parent=5 // pred_region
        %s178 = ssub.s32 %s17, 1
        %s179 = sand.u32 %s44, 1
        %s180 = scalar_lea.sflag [#allocation5], %s179
        %s181 = sand.u32 %s44, 1
        %s182 = smul.addr %s181, 8
        %s183 = scalar_lea.vmem [#allocation4], %s182
        // Predicated region
        $region29: #{tpu_custom_call.1} parent=27 // pred_check
          %p184 = pneg %p57
        $region30: #{tpu_custom_call.1} parent=27 // pred_check_branch
          %186 = sbr.rel (%p184) target = $region32
        $region31: #{tpu_custom_call.1} parent=27 // pred_region
          %187 = dma.done %s180, 128
        $region32: #{tpu_custom_call.1} parent=27 // pred_fallthru
          _
        %s188 = sand.u32 %s72, 1
        %s189 = scalar_lea.sflag [#allocation8], %s188
        %s190 = sand.u32 %s72, 1
        %s191 = smul.addr %s190, 2
        %s192 = scalar_lea.vmem [#allocation7], %s191
        // Predicated region
        $region33: #{tpu_custom_call.1} parent=27 // pred_check
          %p193 = pneg %p85
        $region34: #{tpu_custom_call.1} parent=27 // pred_check_branch
          %195 = sbr.rel (%p193) target = $region36
        $region35: #{tpu_custom_call.1} parent=27 // pred_region
          %196 = dma.done %s189, 32
        $region36: #{tpu_custom_call.1} parent=27 // pred_fallthru
          _
        %s197 = sand.u32 %s44, 1
        %s198 = scalar_lea.sflag [#allocation5], %s197
        %s199 = sand.u32 %s44, 1
        %s200 = smul.addr %s199, 8
        %s201 = scalar_lea.vmem [#allocation4], %s200
        %p202 = pneg %p57
        %p203 = pneg %p54
        %s204 = sand.u32 %s72, 1
        %s205 = scalar_lea.sflag [#allocation8], %s204
        %s206 = sand.u32 %s72, 1
        %s207 = smul.addr %s206, 2
        %s208 = scalar_lea.vmem [#allocation7], %s207
        %p209 = pneg %p85
        %p210 = pneg %p82
        %p211 = pneg %p111
        %p212 = pneg %p108
        %s213 = sand.u32 %s98, 1
        %s214 = scalar_lea.sflag [#allocation6], %s213
        %s215 = sand.u32 %s98, 1
        %s216 = scalar_lea.vmem [#allocation9], %s215
        %s217 = smul.u32 2, %s27
        %s218 = smul.u32 2, %s27
        %p219 = scmp.eq.s32.totalorder %s27, 0
        // Predicated region
        $region37: #{tpu_custom_call.1} parent=27 // pred_check
          %p220 = pneg %p219
        $region38: #{tpu_custom_call.1} parent=27 // pred_check_branch
          %222 = sbr.rel (%p220) target = $region40
        $region39: #{tpu_custom_call.1} parent=27 // pred_region
          %v223 = vlaneseq
          %vm224 = vcmp.ge.s32.totalorder %v223, 0
          %vm225 = vcmp.lt.s32.totalorder %v223, 256
          %vm226 = vmand %vm224, %vm225
          %227 = vst.msk [vmem:[#allocation2] sm:$0x3] %vm226, 0.0
          %228 = vst.msk [vmem:[#allocation3] sm:$0x3] %vm226, 0.0
        $region40: #{tpu_custom_call.1} parent=27 // pred_fallthru
          _
        %v229 = vlaneseq
        %v230 = vshrl.u32 %v229, 7
        %v231 = vlaneseq
        %v232 = vand.u32 %v231, 127
        %v233 = vadd.s32 %v232, 128
        %s234 = smul.u32 %s27, 256
        %v235 = vld [vmem:[%s183] sm:$0xff]
        %v236 = vld [vmem:[%s192] sm:$0x3]
        %v237 = vstv %s234
        %v238 = vadd.s32 %v237, %v232
        %v239 = vadd.s32 %v237, %v233
        %vm240 = vcmp.ge.s32.totalorder %v236, 0
        %vm241 = vcmp.ne.s32.totalorder %v236, 255
        %vm242 = vmand %vm240, %vm241
        %vm243 = vcmp.lt.s32.totalorder %v238, 256
        %vm244 = vcmp.lt.s32.totalorder %v239, 256
        %v245 = vsel %vm243, 1, 0
        %v246 = vsel %vm244, 1, 0
        %v247 = vcombine.low %v245, %v246
        %v249 = vunpack.c.l.s4 1966171168
        %v250 = vunpack.c.0.s8 %v249
        %v251 = vlaneseq
        %v252 = vshrl.u32 %v251, 7
        %v253 = vsub.s32 %v250, %v252
        %v254 = vrot.slane %v247, %v253
        %v256 = vunpack.c.l.s4 1966171168
        %v257 = vunpack.c.0.s8 %v256
        %v258 = vlaneseq
        %v259 = vshrl.u32 %v258, 7
        %v260 = vsub.s32 %v257, %v259
        %v261 = vrot.slane %v254, %v260
        %vm262 = vcmp.ne.s32.totalorder %v261, 0
        %vm263 = vmand %vm242, %vm262
        %v265 = vcombine.high %v235, %v235
        %vm267 = vcmask 1043456
        %v268 = vsel %vm267, %v235, -inf
        %v269 = vrot.slane %v268, 4
        %v270 = vmax.f32 %v268, %v269
        %v271 = vrot.slane %v270, 2
        %v272 = vmax.f32 %v270, %v271
        %v273 = vrot.slane %v272, 1
        %v274 = vmax.f32 %v272, %v273
        %v275 = vsel %vm267, %v265, -inf
        %v276 = vrot.slane %v275, 4
        %v277 = vmax.f32 %v275, %v276
        %v278 = vrot.slane %v277, 2
        %v279 = vmax.f32 %v277, %v278
        %v280 = vrot.slane %v279, 1
        %v281 = vmax.f32 %v279, %v280
        %v284 = vcombine.low %v274, %v281
        %v286 = vsub.f32 %v235, %v284
        %v287 = vmul.f32 %v286, 1.442695
        %v288 = vpow.pop %v287
        %v290 = vcombine.high %v288, %v288
        %v292 = vsel %vm267, %v288, 0.0
        %v293 = vrot.slane %v292, 4
        %v294 = vadd.f32 %v292, %v293
        %v295 = vrot.slane %v294, 2
        %v296 = vadd.f32 %v294, %v295
        %v297 = vrot.slane %v296, 1
        %v298 = vadd.f32 %v296, %v297
        %v299 = vsel %vm267, %v290, 0.0
        %v300 = vrot.slane %v299, 4
        %v301 = vadd.f32 %v299, %v300
        %v302 = vrot.slane %v301, 2
        %v303 = vadd.f32 %v301, %v302
        %v304 = vrot.slane %v303, 1
        %v305 = vadd.f32 %v303, %v304
        %v306 = vlog2.pop %v298
        %v307 = vmul.f32 %v306, 0.6931472
        %v308 = vlog2.pop %v305
        %v309 = vmul.f32 %v308, 0.6931472
        %v310 = vadd.f32 %v274, %v307
        %v311 = vadd.f32 %v281, %v309
        %v312 = vlaneseq
        %v313 = vshrl.u32 %v312, 7
        %v314 = vsub.s32 0, %v313
        %v315 = vrot.slane %v236, %v314
        %v316 = vlaneseq
        %v317 = vshrl.u32 %v316, 7
        %v318 = vsub.s32 1, %v317
        %v319 = vrot.slane %v236, %v318
        %vm320 = vcmp.eq.s32.totalorder %v230, %v315
        %vm321 = vcmp.eq.s32.totalorder %v230, %v319
        %v322 = vsel %vm320, %v235, 0.0
        %v323 = vsel %vm321, %v265, 0.0
        %v324 = vsel %vm267, %v322, 0.0
        %v325 = vrot.slane %v324, 4
        %v326 = vadd.f32 %v324, %v325
        %v327 = vrot.slane %v326, 2
        %v328 = vadd.f32 %v326, %v327
        %v329 = vrot.slane %v328, 1
        %v330 = vadd.f32 %v328, %v329
        %v331 = vsel %vm267, %v323, 0.0
        %v332 = vrot.slane %v331, 4
        %v333 = vadd.f32 %v331, %v332
        %v334 = vrot.slane %v333, 2
        %v335 = vadd.f32 %v333, %v334
        %v336 = vrot.slane %v335, 1
        %v337 = vadd.f32 %v335, %v336
        %v338 = vsub.f32 %v310, %v330
        %v339 = vsub.f32 %v311, %v337
        %v340 = vld [vmem:[#allocation2] sm:$0x3]
        %v343 = vcombine.low %v338, %v339
        %v345 = vunpack.c.l.s4 1966171168
        %v346 = vunpack.c.0.s8 %v345
        %v347 = vlaneseq
        %v348 = vshrl.u32 %v347, 7
        %v349 = vsub.s32 %v346, %v348
        %v350 = vrot.slane %v343, %v349
        %v352 = vunpack.c.l.s4 1966171168
        %v353 = vunpack.c.0.s8 %v352
        %v354 = vlaneseq
        %v355 = vshrl.u32 %v354, 7
        %v356 = vsub.s32 %v353, %v355
        %v357 = vrot.slane %v350, %v356
        %v359 = vsel %vm263, %v357, 0.0
        %v360 = vadd.f32 %v340, %v359
        %v361 = vlaneseq
        %vm362 = vcmp.ge.s32.totalorder %v361, 0
        %vm363 = vcmp.lt.s32.totalorder %v361, 256
        %vm364 = vmand %vm362, %vm363
        %365 = vst.msk [vmem:[#allocation2] sm:$0x3] %vm364, %v360
        %v366 = vld [vmem:[#allocation3] sm:$0x3]
        %v367 = vsel %vm263, 1, 0
        %v368 = vcvt.s32.f32 %v367
        %v369 = vadd.f32 %v366, %v368
        %370 = vst.msk [vmem:[#allocation3] sm:$0x3] %vm364, %v369
        // Predicated region
        $region41: #{tpu_custom_call.1} parent=27 // pred_check
          %p371 = pneg %p219
        $region42: #{tpu_custom_call.1} parent=27 // pred_check_branch
          %373 = sbr.rel (%p371) target = $region44
        $region43: #{tpu_custom_call.1} parent=27 // pred_region
          %v374 = vld [vmem:[#allocation2] sm:$0x3]
          %v376 = vlaneseq
          %v377 = vshrl.u32 %v376, 7
          %v378 = vsub.s32 0, %v377
          %v379 = vrot.slane %v374, %v378
          %v380 = vlaneseq
          %v381 = vshrl.u32 %v380, 7
          %v382 = vsub.s32 1, %v381
          %v383 = vrot.slane %v374, %v382
          %vm386 = vcmask 1040384
          %v387 = vsel %vm386, %v379, 0.0
          %v388 = vsel %vm386, %v383, 0.0
          %v389 = vadd.f32 %v387, %v388
          %390 = vadd.xlane.f32.xlu0 %v389
          %v391 = vpop.xlane.xlu0 %390
          %v392 = vrot.slane %v391, 4
          %v393 = vadd.f32 %v391, %v392
          %v394 = vrot.slane %v393, 2
          %v395 = vadd.f32 %v393, %v394
          %v396 = vrot.slane %v395, 1
          %v397 = vadd.f32 %v395, %v396
          %s398 = vtos %v397
          %v399 = vld [vmem:[#allocation3] sm:$0x3]
          %v401 = vlaneseq
          %v402 = vshrl.u32 %v401, 7
          %v403 = vsub.s32 0, %v402
          %v404 = vrot.slane %v399, %v403
          %v405 = vlaneseq
          %v406 = vshrl.u32 %v405, 7
          %v407 = vsub.s32 1, %v406
          %v408 = vrot.slane %v399, %v407
          %v411 = vsel %vm386, %v404, 0.0
          %v412 = vsel %vm386, %v408, 0.0
          %v413 = vadd.f32 %v411, %v412
          %414 = vadd.xlane.f32.xlu0 %v413
          %v415 = vpop.xlane.xlu0 %414
          %v416 = vrot.slane %v415, 4
          %v417 = vadd.f32 %v415, %v416
          %v418 = vrot.slane %v417, 2
          %v419 = vadd.f32 %v417, %v418
          %v420 = vrot.slane %v419, 1
          %v421 = vadd.f32 %v419, %v420
          %s422 = vtos %v421
          %vm423 = vcmp.eq.s32.totalorder %v232, 0
          %vm424 = vcmp.eq.s32.totalorder %v232, 1
          %vm425 = vcmp.eq.s32.totalorder %v232, 2
          %v426 = vstv %s422
          %v427 = vsel %vm425, %v426, 0.0
          %v428 = vsel %vm424, %v426, %v427
          %v429 = vstv %s398
          %v430 = vsel %vm423, %v429, %v428
          %431 = vst [vmem:[%s216] sm:$0x1] %v430
        $region44: #{tpu_custom_call.1} parent=27 // pred_fallthru
          _
        %s432 = sand.u32 %s98, 1
        %s433 = scalar_lea.sflag [#allocation6], %s432
        %s434 = sand.u32 %s98, 1
        %s435 = scalar_lea.vmem [#allocation9], %s434
        // Predicated region
        $region45: #{tpu_custom_call.1} parent=27 // pred_check
          %p436 = pneg %p108
        $region46: #{tpu_custom_call.1} parent=27 // pred_check_branch
          %438 = sbr.rel (%p436) target = $region48
        $region47: #{tpu_custom_call.1} parent=27 // pred_region
          %s440 = ssub.s32 16, 16
          %441 = vsyncadd %s433, %s440
          %s442 = smul.addr %s26, 16
          %s443 = scalar_lea.hbm %s2, %s442
          %s445 = sshll.u32 %s435, 4
          %s446 = int_to_ptr.vmem [resolvable:$true] %s445
          %448 = dma.vmem_to_hbm [thread:$0]  %s446, 16, %s443, %s433
        $region48: #{tpu_custom_call.1} parent=27 // pred_fallthru
          _
      $region28: #{tpu_custom_call.1} parent=5 // pred_fallthru
        _
      %p449 = scmp.le.s32.totalorder 2, %s17
      // Predicated region
      $region49: #{tpu_custom_call.1} parent=5 // pred_check
        %p450 = pneg %p449
      $region50: #{tpu_custom_call.1} parent=5 // pred_check_branch
        %452 = sbr.rel (%p450) target = $region52
      $region51: #{tpu_custom_call.1} parent=5 // pred_region
        %s453 = ssub.s32 %s17, 2
        // Predicated region
        $region53: #{tpu_custom_call.1} parent=51 // pred_check
          %p454 = pneg %p114
        $region54: #{tpu_custom_call.1} parent=51 // pred_check_branch
          %456 = sbr.rel (%p454) target = $region56
        $region55: #{tpu_custom_call.1} parent=51 // pred_region
          %s457 = sand.u32 %s99, 1
          %s458 = scalar_lea.sflag [#allocation6], %s457
          %s459 = sand.u32 %s99, 1
          %s460 = scalar_lea.vmem [#allocation9], %s459
          %461 = dma.done %s458, 16
        $region56: #{tpu_custom_call.1} parent=51 // pred_fallthru
          _
      $region52: #{tpu_custom_call.1} parent=5 // pred_fallthru
        _
    $region6: #{tpu_custom_call.1} parent=1 // loop_footer
      %s21 = sadd.s32 1, %s17
    $region7: #{tpu_custom_call.1} parent=1 // loop_footer_branch
      %16 = sbr.rel target = $region3
    $region8: #{tpu_custom_call.1} parent=1 // loop_exit
      _
    %462 = vsyncpa [#allocation5], 1
    %s463 = scalar_lea.sflag [#allocation5], 1
    %464 = vsyncpa %s463, 1
    %465 = vsyncpa [#allocation8], 1
    %s466 = scalar_lea.sflag [#allocation8], 1
    %467 = vsyncpa %s466, 1
    %468 = vsyncpa [#allocation6], 1
    %s469 = scalar_lea.sflag [#allocation6], 1
    %470 = vsyncpa %s469, 1

</llo_original>
